<compile_context>
chip_gen: v5e
topology: v5e:2x2
jax: 0.10.0
libtpu: 0.0.40
codegen_flags: <defaults>
</compile_context>

<pallas_src>
import functools
import math

import jax
import jax.numpy as jnp
from jax.experimental import pallas as pl
from jax.experimental.pallas import tpu as pltpu


# -----------------------------------------------------------------------------
# LayerNorm math shared by the plain and fused kernels.
# -----------------------------------------------------------------------------
def _ln_math(x, g, b, out_dtype, *, eps, feat, feat_padded):
    """x: (tm, Dp) f32; g/b: (1, Dp) f32.  PyTorch LayerNorm-module semantics."""
    needs_mask = feat_padded != feat
    if needs_mask:
        lane = jax.lax.broadcasted_iota(jnp.int32, x.shape, x.ndim - 1)
        valid = lane < feat
        x = jnp.where(valid, x, 0.0)
    mean = jnp.sum(x, axis=-1, keepdims=True) * (1.0 / feat)          # (tm, 1)
    xc = x - mean
    if needs_mask:
        xc = jnp.where(valid, xc, 0.0)
    # PyTorch x.std(-1) is unbiased (divide by D-1); eps is added to the std.
    var = jnp.sum(xc * xc, axis=-1, keepdims=True) * (1.0 / (feat - 1))
    inv = 1.0 / (jnp.sqrt(var) + eps)                                  # (tm, 1)
    return (g * (xc * inv) + b).astype(out_dtype)


def _layernorm_kernel(x_ref, g_ref, b_ref, o_ref, *, eps, feat, feat_padded):
    x = x_ref[...].astype(jnp.float32)
    o_ref[...] = _ln_math(x, g_ref[...], b_ref[...], o_ref.dtype,
                          eps=eps, feat=feat, feat_padded=feat_padded)


def _layernorm_fused_kernel(x_ref, aux_ref, g_ref, b_ref, o_ref, *,
                            eps, feat, feat_padded, prologue):
    # Fused elementwise epilogue of the last encoder layer: runs on the f32
    # block before the LN reduction (row-local, so safe with ragged rows).
    x = x_ref[...].astype(jnp.float32)          # (tm, Dp)
    aux = aux_ref[...].astype(jnp.float32)      # (tm, 1) per-row mask
    x = prologue(x, aux)
    o_ref[...] = _ln_math(x, g_ref[...], b_ref[...], o_ref.dtype,
                          eps=eps, feat=feat, feat_padded=feat_padded)


# -----------------------------------------------------------------------------
# Tile sizing helpers.
# -----------------------------------------------------------------------------
def _round_up(a, b):
    return ((a + b - 1) // b) * b


def _sublane_multiple(dtype):
    # 8 for 4-byte dtypes, 16 for 2-byte (bf16), 32 for 1-byte (int8/fp8).
    return max(8, 32 // jnp.dtype(dtype).itemsize)


def _choose_tile_rows(M, Dp, in_item, out_item, aux_item, sub,
                      target_tile_bytes):
    bytes_per_row = Dp * (in_item + out_item) + aux_item
    tm = max(sub, (target_tile_bytes // max(bytes_per_row, 1)) // sub * sub)
    tm = min(tm, _round_up(M, sub))
    # Guarantee >= 2 grid steps (when rows allow) so the "parallel" row axis
    # actually shards across both TensorCores on v7x.
    if M > 2 * sub:
        tm = min(tm, _round_up((M + 1) // 2, sub))
    return max(tm, sub)


# -----------------------------------------------------------------------------
# Pallas LayerNorm (optionally with a fused elementwise prologue).
# -----------------------------------------------------------------------------
def pallas_layernorm(x, a_2, b_2, eps=1e-6, *, prologue=None, aux=None,
                     target_tile_bytes=4 << 20):
    """LayerNorm over the last dim with PyTorch-module semantics.

    If `prologue` is given it is applied in-kernel to the f32 (tm, Dp) block
    (with a per-row (tm, 1) `aux` value, e.g. the mask) before the reduction.
    """
    orig_shape = x.shape
    D = orig_shape[-1]
    if D < 2:
        # PyTorch's unbiased std is NaN for a single feature; reject early.
        raise ValueError("pallas_layernorm requires features >= 2")
    M = math.prod(orig_shape[:-1])
    x2 = x.reshape(M, D)

    # Lane-dense feature dim: pad to a multiple of 128 only when needed (a
    # no-op for d_model in {128, 256, 512, ...} -> no extra HBM traffic).
    Dp = _round_up(D, 128)
    if Dp != D:
        x2 = jnp.pad(x2, ((0, 0), (0, Dp - D)))

    # Affine params stay in f32 (tiny resident blocks; kernel computes in f32).
    g2 = jnp.asarray(a_2, jnp.float32).reshape(1, D)
    s2 = jnp.asarray(b_2, jnp.float32).reshape(1, D)
    if Dp != D:
        g2 = jnp.pad(g2, ((0, 0), (0, Dp - D)), constant_values=1.0)
        s2 = jnp.pad(s2, ((0, 0), (0, Dp - D)))

    out_dtype = x.dtype
    have_aux = prologue is not None
    if have_aux:
        if aux is None:
            raise ValueError("prologue requires aux")
        aux2 = jnp.asarray(aux, jnp.float32).reshape(M, 1)

    in_item = jnp.dtype(x.dtype).itemsize
    out_item = jnp.dtype(out_dtype).itemsize
    aux_item = 4 if have_aux else 0
    sub = _sublane_multiple(x.dtype)

    tm = _choose_tile_rows(M, Dp, in_item, out_item, aux_item, sub,
                           target_tile_bytes)
    # Ragged last block: out-of-range rows read garbage (row-local only) and
    # their writeback is masked -> no jnp.pad / [:M] slice passes over HBM.
    grid = (pl.cdiv(M, tm),)

    # Real VMEM need: double-buffered in/out(/aux) tiles + resident gamma/beta
    # + headroom, capped below v7x's 64 MiB physical VMEM per TensorCore.
    tile_bytes = tm * Dp * (in_item + out_item) + tm * aux_item
    vmem_req = 2 * tile_bytes + 4 * Dp * 4 + (2 << 20)
    vmem_limit = int(min(max(vmem_req, 16 << 20), 48 << 20))

    in_specs = [pl.BlockSpec((tm, Dp), lambda i: (i, 0))]
    args = [x2]
    if have_aux:
        in_specs.append(pl.BlockSpec((tm, 1), lambda i: (i, 0)))
        args.append(aux2)
    in_specs += [pl.BlockSpec((1, Dp), lambda i: (0, 0)),
                 pl.BlockSpec((1, Dp), lambda i: (0, 0))]
    args += [g2, s2]

    if have_aux:
        kernel = functools.partial(_layernorm_fused_kernel, eps=eps, feat=D,
                                   feat_padded=Dp, prologue=prologue)
    else:
        kernel = functools.partial(_layernorm_kernel, eps=eps, feat=D,
                                   feat_padded=Dp)

    out = pl.pallas_call(
        kernel,
        out_shape=jax.ShapeDtypeStruct((M, Dp), out_dtype),
        grid_spec=pltpu.PrefetchScalarGridSpec(
            num_scalar_prefetch=0,
            grid=grid,
            in_specs=in_specs,
            out_specs=pl.BlockSpec((tm, Dp), lambda i: (i, 0)),
        ),
        compiler_params=pltpu.CompilerParams(
            dimension_semantics=("parallel",),
            vmem_limit_bytes=vmem_limit,
        ),
    )(*args)

    if Dp != D:
        out = out[:, :D]
    return out.reshape(orig_shape)


# -----------------------------------------------------------------------------
# Encoder: apply N layers, then the Pallas LayerNorm (last layer fused when
# it exposes an elementwise form).
# -----------------------------------------------------------------------------
class PallasEncoder:
    """Mirror of the PyTorch Encoder: stack of layers + final LayerNorm."""

    def __init__(self, layers, d_model, eps=1e-6, a_2=None, b_2=None):
        self.layers = list(layers)      # callables: (x, mask) -> x
        self.a_2 = (jnp.ones((d_model,), jnp.float32) if a_2 is None
                    else jnp.asarray(a_2, jnp.float32))
        self.b_2 = (jnp.zeros((d_model,), jnp.float32) if b_2 is None
                    else jnp.asarray(b_2, jnp.float32))
        self.eps = eps

    def __call__(self, x, mask):
        layers = self.layers
        fused_fn = None
        if layers and getattr(layers[-1], "pallas_elementwise", None) is not None:
            fused_fn = layers[-1].pallas_elementwise
            layers = layers[:-1]
        for layer in layers:
            x = layer(x, mask)
        if fused_fn is not None:
            # Fuse the last layer's elementwise epilogue into the LN kernel
            # (removes one full HBM read+write of the (N, L, D) tensor).
            return pallas_layernorm(x, self.a_2, self.b_2, self.eps,
                                    prologue=fused_fn, aux=mask)
        return pallas_layernorm(x, self.a_2, self.b_2, self.eps)


class _DemoResidualLayer:
    """Deterministic stand-in for the (unspecified) EncoderLayer."""

    def __init__(self, scale):
        self.scale = scale

    def __call__(self, x, mask):
        return x + self.scale * jnp.tanh(x) * mask[..., None]

    def pallas_elementwise(self, x, row_mask):
        # Row-local elementwise form used as a fused LN prologue.
        # x: (tm, Dp) f32, row_mask: (tm, 1) f32.
        return x + self.scale * jnp.tanh(x) * row_mask


# -----------------------------------------------------------------------------
# Pure-JAX reference (mirrors the PyTorch forward for verification).
# -----------------------------------------------------------------------------
def _ref_layernorm(x, a_2, b_2, eps=1e-6):
    mean = x.mean(-1, keepdims=True)
    var = ((x - mean) ** 2).sum(-1, keepdims=True) / (x.shape[-1] - 1)
    std = jnp.sqrt(var)
    return a_2 * (x - mean) / (std + eps) + b_2


def _ref_encoder(x, mask, layers, a_2, b_2, eps=1e-6):
    for layer in layers:
        x = layer(x, mask)
    return _ref_layernorm(x, a_2, b_2, eps)


if __name__ == "__main__":
    key = jax.random.PRNGKey(0)
    k1, k2, k3, k4 = jax.random.split(key, 4)

    # --- Encoder-shaped test: batch=2, seq=8, hidden=32, N=2 layers --------
    # (exercises feature padding to 128 lanes + fused last-layer epilogue)
    N, L, D = 2, 8, 32
    x = jax.random.normal(k1, (N, L, D), dtype=jnp.float32)
    mask = (jax.random.uniform(k2, (N, L)) > 0.2).astype(jnp.float32)
    a_2 = 1.0 + 0.1 * jax.random.normal(k3, (D,), dtype=jnp.float32)
    b_2 = 0.1 * jax.random.normal(k4, (D,), dtype=jnp.float32)

    layers = [_DemoResidualLayer(0.5), _DemoResidualLayer(0.25)]
    enc = PallasEncoder(layers, D, eps=1e-6, a_2=a_2, b_2=b_2)

    out = enc(x, mask)
    jax.block_until_ready(out)
    ref = _ref_encoder(x, mask, layers, a_2, b_2, eps=1e-6)
    assert out.shape == (N, L, D)
    assert jnp.allclose(out, ref, rtol=2e-5, atol=2e-5)

    # --- ragged row grid (M=404 not a multiple of tm), lane-dense D=256 ----
    N2, L2, D2 = 4, 101, 256
    x2 = jax.random.normal(k2, (N2, L2, D2), dtype=jnp.float32)
    g2 = 1.0 + 0.05 * jax.random.normal(k3, (D2,), dtype=jnp.float32)
    s2 = 0.05 * jax.random.normal(k4, (D2,), dtype=jnp.float32)

    out2 = pallas_layernorm(x2, g2, s2, eps=1e-6)
    jax.block_until_ready(out2)
    ref2 = _ref_layernorm(x2, g2, s2, eps=1e-6)
    assert jnp.allclose(out2, ref2, rtol=1e-5, atol=1e-5)

    # --- bf16 activations: dtype-aware sublane tiling + f32 gamma/beta -----
    N3, L3, D3 = 2, 40, 512
    x3 = jax.random.normal(k1, (N3, L3, D3), dtype=jnp.float32).astype(jnp.bfloat16)
    g3 = 1.0 + 0.05 * jax.random.normal(k3, (D3,), dtype=jnp.float32)
    s3 = 0.05 * jax.random.normal(k4, (D3,), dtype=jnp.float32)

    out3 = pallas_layernorm(x3, g3, s3, eps=1e-6)
    jax.block_until_ready(out3)
    ref3 = _ref_layernorm(x3.astype(jnp.float32), g3, s3, eps=1e-6)
    assert out3.dtype == jnp.bfloat16
    assert jnp.allclose(out3.astype(jnp.float32), ref3, rtol=0.05, atol=0.05)

    print("KERNEL_OK")
</pallas_src>

<mosaic_0001>
module attributes {stable_mosaic.version = 11 : i64} {
  func.func @_layernorm_fused_kernel(%arg0: i32, %arg1: memref<16x128xf32, #tpu.memory_space<vmem>>, %arg2: memref<16x1xf32, #tpu.memory_space<vmem>>, %arg3: memref<1x128xf32, #tpu.memory_space<vmem>>, %arg4: memref<1x128xf32, #tpu.memory_space<vmem>>, %arg5: memref<16x128xf32, #tpu.memory_space<vmem>>) attributes {dimension_semantics = [#tpu.dimension_semantics<parallel>], iteration_bounds = array<i64: 1>, scalar_prefetch = 0 : i64, scratch_operands = 0 : i64, tpu.core_type = #tpu.core_type<tc>, window_params = [{transform_indices = @transform_0, window_bounds = array<i64: 16, 128>}, {transform_indices = @transform_1, window_bounds = array<i64: 16, 1>}, {pipeline_mode = #tpu.pipeline_mode<synchronous>, transform_indices = @transform_2, window_bounds = array<i64: 1, 128>}, {pipeline_mode = #tpu.pipeline_mode<synchronous>, transform_indices = @transform_3, window_bounds = array<i64: 1, 128>}, {transform_indices = @transform_4, window_bounds = array<i64: 16, 128>}]} {
    %c0 = arith.constant 0 : index
    %c0_0 = arith.constant 0 : index
    %0 = vector.load %arg1[%c0, %c0_0] : memref<16x128xf32, #tpu.memory_space<vmem>>, vector<16x128xf32>
    %c0_1 = arith.constant 0 : index
    %c0_2 = arith.constant 0 : index
    %1 = vector.load %arg2[%c0_1, %c0_2] : memref<16x1xf32, #tpu.memory_space<vmem>>, vector<16x1xf32>
    %2 = math.tanh %0 : vector<16x128xf32>
    %cst = arith.constant 2.500000e-01 : f32
    %3 = vector.broadcast %cst : f32 to vector<16x128xf32>
    %4 = arith.mulf %3, %2 : vector<16x128xf32>
    %5 = vector.broadcast %1 : vector<16x1xf32> to vector<16x128xf32>
    %6 = arith.mulf %4, %5 : vector<16x128xf32>
    %7 = arith.addf %0, %6 : vector<16x128xf32>
    %c0_3 = arith.constant 0 : index
    %c0_4 = arith.constant 0 : index
    %8 = vector.load %arg3[%c0_3, %c0_4] : memref<1x128xf32, #tpu.memory_space<vmem>>, vector<1x128xf32>
    %c0_5 = arith.constant 0 : index
    %c0_6 = arith.constant 0 : index
    %9 = vector.load %arg4[%c0_5, %c0_6] : memref<1x128xf32, #tpu.memory_space<vmem>>, vector<1x128xf32>
    %10 = tpu.iota {dimensions = array<i32: 1>} : vector<16x128xi32>
    %c32_i32 = arith.constant 32 : i32
    %11 = vector.broadcast %c32_i32 : i32 to vector<16x128xi32>
    %12 = arith.cmpi slt, %10, %11 : vector<16x128xi32>
    %cst_7 = arith.constant 0.000000e+00 : f32
    %13 = vector.broadcast %cst_7 : f32 to vector<16x128xf32>
    %14 = arith.select %12, %7, %13 : vector<16x128xi1>, vector<16x128xf32>
    %cst_8 = arith.constant dense<0.000000e+00> : vector<16xf32>
    %15 = vector.multi_reduction <add>, %14, %cst_8 [1] : vector<16x128xf32> to vector<16xf32>
    %16 = vector.shape_cast %15 : vector<16xf32> to vector<16x1xf32>
    %cst_9 = arith.constant 3.125000e-02 : f32
    %17 = vector.broadcast %cst_9 : f32 to vector<16x1xf32>
    %18 = arith.mulf %16, %17 : vector<16x1xf32>
    %19 = vector.broadcast %18 : vector<16x1xf32> to vector<16x128xf32>
    %20 = arith.subf %14, %19 : vector<16x128xf32>
    %cst_10 = arith.constant 0.000000e+00 : f32
    %21 = vector.broadcast %cst_10 : f32 to vector<16x128xf32>
    %22 = arith.select %12, %20, %21 : vector<16x128xi1>, vector<16x128xf32>
    %23 = arith.mulf %22, %22 : vector<16x128xf32>
    %cst_11 = arith.constant dense<0.000000e+00> : vector<16xf32>
    %24 = vector.multi_reduction <add>, %23, %cst_11 [1] : vector<16x128xf32> to vector<16xf32>
    %25 = vector.shape_cast %24 : vector<16xf32> to vector<16x1xf32>
    %cst_12 = arith.constant 0.0322580636 : f32
    %26 = vector.broadcast %cst_12 : f32 to vector<16x1xf32>
    %27 = arith.mulf %25, %26 : vector<16x1xf32>
    %28 = math.sqrt %27 : vector<16x1xf32>
    %cst_13 = arith.constant 9.99999997E-7 : f32
    %29 = vector.broadcast %cst_13 : f32 to vector<16x1xf32>
    %30 = arith.addf %28, %29 : vector<16x1xf32>
    %cst_14 = arith.constant 1.000000e+00 : f32
    %31 = vector.broadcast %cst_14 : f32 to vector<16x1xf32>
    %32 = arith.divf %31, %30 : vector<16x1xf32>
    %33 = vector.broadcast %32 : vector<16x1xf32> to vector<16x128xf32>
    %34 = arith.mulf %22, %33 : vector<16x128xf32>
    %35 = vector.broadcast %8 : vector<1x128xf32> to vector<16x128xf32>
    %36 = arith.mulf %35, %34 : vector<16x128xf32>
    %37 = vector.broadcast %9 : vector<1x128xf32> to vector<16x128xf32>
    %38 = arith.addf %36, %37 : vector<16x128xf32>
    %c0_15 = arith.constant 0 : index
    %c0_16 = arith.constant 0 : index
    %39 = vector.load %arg5[%c0_15, %c0_16] : memref<16x128xf32, #tpu.memory_space<vmem>>, vector<16x128xf32>
    tpu.vector_store %arg5[%c0_15, %c0_16], %38 {strides = array<i32>} : memref<16x128xf32, #tpu.memory_space<vmem>>, vector<16x128xf32>,
    return
  }
  func.func @transform_0(%arg0: i32) -> (i32, i32) {
    %c0_i32 = arith.constant 0 : i32
    %c0_i32_0 = arith.constant 0 : i32
    return %arg0, %c0_i32 : i32, i32
  }
  func.func @transform_1(%arg0: i32) -> (i32, i32) {
    %c0_i32 = arith.constant 0 : i32
    %c0_i32_0 = arith.constant 0 : i32
    return %arg0, %c0_i32 : i32, i32
  }
  func.func @transform_2(%arg0: i32) -> (i32, i32) {
    %c0_i32 = arith.constant 0 : i32
    %c0_i32_0 = arith.constant 0 : i32
    %c0_i32_1 = arith.constant 0 : i32
    return %c0_i32, %c0_i32_0 : i32, i32
  }
  func.func @transform_3(%arg0: i32) -> (i32, i32) {
    %c0_i32 = arith.constant 0 : i32
    %c0_i32_0 = arith.constant 0 : i32
    %c0_i32_1 = arith.constant 0 : i32
    return %c0_i32, %c0_i32_0 : i32, i32
  }
  func.func @transform_4(%arg0: i32) -> (i32, i32) {
    %c0_i32 = arith.constant 0 : i32
    %c0_i32_0 = arith.constant 0 : i32
    return %arg0, %c0_i32 : i32, i32
  }
}

</mosaic_0001>

<llo_original>
// kernel: tpu_custom_call.1
$region0: #{tpu_custom_call.1}
  #allocation0 [shape = 'u32[]', space=smem, size = 0x4, offset = 0x4, fixed_abs, tag = 'smem constant byte address 0x4 - core index']
  #allocation1 [shape = 'u32[72,128]{1,0:T(1,128)}', space=vmem, size = 0x9000, scoped, tag = 'internal scratch']
  %s0 = inlined_call_operand.vmem [shape: f32[16,128], index: 0, kind: input, shape index: {}]
  %s1 = inlined_call_operand.vmem [shape: f32[16,1], index: 1, kind: input, shape index: {}]
  %s2 = inlined_call_operand.vmem [shape: f32[1,128], index: 2, kind: input, shape index: {}]
  %s3 = inlined_call_operand.vmem [shape: f32[1,128], index: 3, kind: input, shape index: {}]
  %s4 = inlined_call_operand.hbm [shape: f32[16,128], index: 4, kind: output, shape index: {}]
  %s5 = sld [smem:[#allocation0]]
  $region26: #{tpu_custom_call.1} parent=0
    _
  %s7 = ssub.s32 1, %s5
  %s8 = scalar_select 0, %s7, %s5
  $region1: #{tpu_custom_call.1} parent=0
    #allocation2 [shape = 'u8[8192]{0}', space=vmem, size = 0x2000, scoped, tag = 'output window, operand 0, single buffered']
    #allocation3 [shape = 's32[1]{0}', space=sflag, size = 0x4, scoped, tag = 'scoped memory for tpu_custom_call.1']
    %9 = vsyncpa [#allocation3], 0
    // Predicated region
    $region2: #{tpu_custom_call.1} parent=1 // pred_check
      _
    $region3: #{tpu_custom_call.1} parent=1 // pred_check_branch
      %11 = sbr.rel (0) target = $region5
    $region4: #{tpu_custom_call.1} parent=1 // pred_region
      _
    $region5: #{tpu_custom_call.1} parent=1 // pred_fallthru
      _
    // Predicated region
    $region6: #{tpu_custom_call.1} parent=1 // pred_check
      _
    $region7: #{tpu_custom_call.1} parent=1 // pred_check_branch
      %13 = sbr.rel (0) target = $region9
    $region8: #{tpu_custom_call.1} parent=1 // pred_region
      _
    $region9: #{tpu_custom_call.1} parent=1 // pred_fallthru
      _
    // Predicated region
    $region10: #{tpu_custom_call.1} parent=1 // pred_check
      _
    $region11: #{tpu_custom_call.1} parent=1 // pred_check_branch
      %15 = sbr.rel (0) target = $region13
    $region12: #{tpu_custom_call.1} parent=1 // pred_region
      _
    $region13: #{tpu_custom_call.1} parent=1 // pred_fallthru
      _
    // Predicated region
    $region14: #{tpu_custom_call.1} parent=1 // pred_check
      _
    $region15: #{tpu_custom_call.1} parent=1 // pred_check_branch
      %17 = sbr.rel (0) target = $region17
    $region16: #{tpu_custom_call.1} parent=1 // pred_region
      _
    $region17: #{tpu_custom_call.1} parent=1 // pred_fallthru
      _
    %v18 = vld [vmem:[%s0] sm:$0xff]
    %v19 = vld [vmem:[%s0 + $0x8] sm:$0xff]
    %v20 = vld [vmem:[%s1] sm:$0xff]
    %v21 = vld [vmem:[%s1 + $0x8] sm:$0xff]
    %v22 = vtanh.pop %v18
    %v23 = vtanh.pop %v19
    %v24 = vmul.f32 %v22, 0.25
    %v25 = vmul.f32 %v23, 0.25
    %27 = vset.pattern.permute.xlu0 0
    %28 = vperm.xlu0 %27, %v20
    %v29 = vpop.permute.xlu0 %28
    %32 = vset.pattern.permute.xlu0 0
    %33 = vperm.xlu0 %32, %v21
    %v34 = vpop.permute.xlu0 %33
    %v36 = vmul.f32 %v24, %v29
    %v37 = vmul.f32 %v25, %v34
    %v38 = vadd.f32 %v18, %v36
    %v39 = vadd.f32 %v19, %v37
    %v40 = vld [vmem:[%s2] sm:$0x1]
    %v41 = vld [vmem:[%s3] sm:$0x1]
    %v42 = vlaneseq
    %v43 = vand.u32 %v42, 127
    %vm44 = vcmp.lt.s32.totalorder %v43, 32
    %v45 = vsel %vm44, %v38, 0.0
    %v46 = vsel %vm44, %v39, 0.0
    %47 = vadd.xlane.f32.xlu0 %v45
    %v48 = vpop.xlane.xlu0 %47
    %49 = vadd.xlane.f32.xlu0 %v46
    %v50 = vpop.xlane.xlu0 %49
    %v51 = vmul.f32 %v48, 0.03125
    %v52 = vmul.f32 %v50, 0.03125
    %v53 = vsub.f32 %v45, %v51
    %v54 = vsub.f32 %v46, %v52
    %v55 = vsel %vm44, %v53, 0.0
    %v56 = vsel %vm44, %v54, 0.0
    %v57 = vmul.f32 %v55, %v55
    %v58 = vmul.f32 %v56, %v56
    %59 = vadd.xlane.f32.xlu0 %v57
    %v60 = vpop.xlane.xlu0 %59
    %61 = vadd.xlane.f32.xlu0 %v58
    %v62 = vpop.xlane.xlu0 %61
    %v63 = vmul.f32 %v60, 0.032258064
    %v64 = vmul.f32 %v62, 0.032258064
    %v65 = vrsqrt.pop %v63
    %v66 = vmul.f32 %v65, %v63
    %v67 = vmul.f32 %v66, %v65
    %v68 = vmul.f32 0.5, %v67
    %v69 = vsub.f32 1.5, %v68
    %v70 = vmul.f32 %v65, %v69
    %v71 = vmul.f32 %v63, %v70
    %vm72 = vcmp.eq.f32.partialorder %v63, inf
    %v73 = vsel %vm72, %v63, %v71
    %vm74 = vcmp.eq.f32.partialorder %v63, 0.0
    %v75 = vand.u32 %v63, 2147483648
    %v76 = vsel %vm74, %v75, %v73
    %v77 = vrsqrt.pop %v64
    %v78 = vmul.f32 %v77, %v64
    %v79 = vmul.f32 %v78, %v77
    %v80 = vmul.f32 0.5, %v79
    %v81 = vsub.f32 1.5, %v80
    %v82 = vmul.f32 %v77, %v81
    %v83 = vmul.f32 %v64, %v82
    %vm84 = vcmp.eq.f32.partialorder %v64, inf
    %v85 = vsel %vm84, %v64, %v83
    %vm86 = vcmp.eq.f32.partialorder %v64, 0.0
    %v87 = vand.u32 %v64, 2147483648
    %v88 = vsel %vm86, %v87, %v85
    %v89 = vadd.f32 %v76, 1e-06
    %v90 = vadd.f32 %v88, 1e-06
    %v91 = vrcp.pop %v89
    %v92 = vmul.f32 %v89, %v91
    %v93 = vsub.f32 1.0, %v92
    %v94 = vmul.f32 %v91, %v93
    %v95 = vadd.f32 %v91, %v94
    %vm96 = vweird.f32 %v89
    %vm97 = vweird.f32 %v91
    %vm98 = vmor %vm96, %vm97
    %v99 = vsel %vm98, %v91, %v95
    %v100 = vand.u32 2147483647, %v89
    %vm101 = vcmp.eq.f32.partialorder %v100, 8.507059e+37
    %v102 = vand.u32 %v89, 2147483648
    %v103 = vor.u32 1.1754944e-38, %v102
    %v104 = vsel %vm101, %v103, %v99
    %v105 = vmul.f32 1.0, %v104
    %v106 = vrcp.pop %v90
    %v107 = vmul.f32 %v90, %v106
    %v108 = vsub.f32 1.0, %v107
    %v109 = vmul.f32 %v106, %v108
    %v110 = vadd.f32 %v106, %v109
    %vm111 = vweird.f32 %v90
    %vm112 = vweird.f32 %v106
    %vm113 = vmor %vm111, %vm112
    %v114 = vsel %vm113, %v106, %v110
    %v115 = vand.u32 2147483647, %v90
    %vm116 = vcmp.eq.f32.partialorder %v115, 8.507059e+37
    %v117 = vand.u32 %v90, 2147483648
    %v118 = vor.u32 1.1754944e-38, %v117
    %v119 = vsel %vm116, %v118, %v114
    %v120 = vmul.f32 1.0, %v119
    %v121 = vmul.f32 %v55, %v105
    %v122 = vmul.f32 %v56, %v120
    %v124 = vperm.slane %v40, 0
    %v126 = vmul.f32 %v124, %v121
    %v127 = vmul.f32 %v124, %v122
    %v129 = vperm.slane %v41, 0
    %v131 = vadd.f32 %v126, %v129
    %v132 = vadd.f32 %v127, %v129
    %133 = vst [vmem:[#allocation2] sm:$0xff] %v131
    %134 = vst [vmem:[#allocation2 + $0x8] sm:$0xff] %v132
    // Predicated region
    $region18: #{tpu_custom_call.1} parent=1 // pred_check
      _
    $region19: #{tpu_custom_call.1} parent=1 // pred_check_branch
      %136 = sbr.rel (0) target = $region21
    $region20: #{tpu_custom_call.1} parent=1 // pred_region
      %138 = vsyncadd [#allocation3], 0
      %s139 = sshll.u32 [#allocation2], 4
      %s140 = int_to_ptr.vmem [resolvable:$true] %s139
      %s141 = sshll.u32 %s4, 4
      %s142 = int_to_ptr.hbm [resolvable:$true] %s141
      %147 = dma.vmem_to_hbm [thread:$0]  %s140, 256, %s142, [#allocation3], 128, 128, 8
    $region21: #{tpu_custom_call.1} parent=1 // pred_fallthru
      _
    // Predicated region
    $region22: #{tpu_custom_call.1} parent=1 // pred_check
      _
    $region23: #{tpu_custom_call.1} parent=1 // pred_check_branch
      %149 = sbr.rel (0) target = $region25
    $region24: #{tpu_custom_call.1} parent=1 // pred_region
      %151 = dma.done [#allocation3], 256
    $region25: #{tpu_custom_call.1} parent=1 // pred_fallthru
      _
    %152 = vsyncpa [#allocation3], 1

</llo_original>
